<compile_context>
chip_gen: v5e
topology: v5e:2x2
jax: 0.10.0
libtpu: 0.0.40
codegen_flags: <defaults>
</compile_context>

<pallas_src>
import math

import jax
import jax.numpy as jnp
from jax.experimental import pallas as pl
from jax.experimental.pallas import tpu as pltpu

_MB = 1024 * 1024


def _round_up(x: int, m: int) -> int:
    return ((x + m - 1) // m) * m


def _pick_tile(dim: int, target: int, align: int):
    """Pick (tile, padded_dim).

    Prefers (a) one tile covering the whole dim, then (b) a tile that divides
    `dim` exactly (no padded HBM copy of the operand), then (c) padding up to a
    multiple of `target`.
    """
    dim_a = _round_up(dim, align)
    if dim_a <= target:
        return dim_a, dim_a
    tile = (target // align) * align
    t = tile
    while t >= 128:
        if dim % t == 0:
            return t, dim          # exact divisor: no padding needed
        t -= align
    return tile, _round_up(dim, tile)


def _prepare(arr, rows_p: int, cols_p: int, dtype):
    """Cast / zero-pad only when necessary (avoid materializing HBM copies)."""
    if arr.dtype != dtype:
        arr = arr.astype(dtype)
    r, c = arr.shape
    if r != rows_p or c != cols_p:
        arr = jnp.pad(arr, ((0, rows_p - r), (0, cols_p - c)))
    return arr


def _mm_single_pass_kernel(a_ref, b_ref, bias_ref, o_ref):
    # One MXU pass per row block.  B and bias are fully VMEM-resident (their
    # block index is constant), so the big operand A streams exactly once and
    # there is no K loop, no accumulator init/finalize.
    acc = jnp.dot(a_ref[...], b_ref[...], preferred_element_type=jnp.float32)
    o_ref[...] = (acc + bias_ref[...]).astype(o_ref.dtype)


def _mm_ktiled_kernel(a_ref, b_ref, bias_ref, o_ref):
    # General K-tiled fallback.  The f32 output block is resident across the k
    # axis, so accumulate directly into o_ref: no scratch, no extra full-tile
    # copy in the epilogue (cheap on v5e's single vector-store slot).
    k = pl.program_id(2)

    @pl.when(k == 0)
    def _init():
        o_ref[...] = jnp.zeros_like(o_ref)

    o_ref[...] += jnp.dot(a_ref[...], b_ref[...],
                          preferred_element_type=jnp.float32)

    @pl.when(k == pl.num_programs(2) - 1)
    def _finalize():
        o_ref[...] = o_ref[...] + bias_ref[...]


def pallas_matmul(a, b, bias=None, *, compute_dtype=jnp.bfloat16,
                  out_dtype=jnp.float32, tm=512, tn=512, tk=512,
                  allow_single_pass=True):
    """out = a @ b (+ bias) with f32 MXU accumulation.

    a: [M, K], b: [K, N], bias: optional [N].  Returns [M, N] in out_dtype.
    """
    M, K = a.shape
    K2, N = b.shape
    assert K == K2, (a.shape, b.shape)

    csize = jnp.dtype(compute_dtype).itemsize
    osize = jnp.dtype(out_dtype).itemsize
    # bf16 packed layout wants (16, 128) min tiles -> 16-aligned row tiles.
    sub_align = 16 if csize == 2 else 8

    tm_, Mp = _pick_tile(M, tm, sub_align)

    # ---- path selection: resident-B single pass vs. general K-tiled ---------
    Kp_sp = _round_up(K, sub_align)   # K is lane dim of A: full-dim block is OK
    Np_sp = _round_up(N, 128)         # lane-dense output columns
    a_blk = tm_ * Kp_sp * csize
    b_blk = Kp_sp * Np_sp * csize
    o_blk = tm_ * Np_sp * osize
    sp_vmem = 2 * (a_blk + o_blk + Np_sp * 4) + 2 * b_blk
    use_single = (allow_single_pass and Np_sp <= 2048
                  and b_blk <= 16 * _MB and sp_vmem <= 40 * _MB)

    if use_single:
        Kp, Np = Kp_sp, Np_sp
        a_p = _prepare(a, Mp, Kp, compute_dtype)
        b_p = _prepare(b, Kp, Np, compute_dtype)
        if bias is None:
            bias_p = jnp.zeros((1, Np), jnp.float32)
        else:
            bias_p = _prepare(bias.astype(jnp.float32).reshape(1, N), 1, Np,
                              jnp.float32)
        grid = (Mp // tm_,)
        cost = pl.CostEstimate(
            flops=2 * Mp * Np * Kp, transcendentals=0,
            bytes_accessed=Mp * Kp * csize + Kp * Np * csize
                           + Mp * Np * osize + Np * 4)
        out_p = pl.pallas_call(
            _mm_single_pass_kernel,
            grid=grid,
            in_specs=[
                pl.BlockSpec((tm_, Kp), lambda i: (i, 0)),
                pl.BlockSpec((Kp, Np), lambda i: (0, 0)),   # fully VMEM-resident
                pl.BlockSpec((1, Np), lambda i: (0, 0)),
            ],
            out_specs=pl.BlockSpec((tm_, Np), lambda i: (i, 0)),
            out_shape=jax.ShapeDtypeStruct((Mp, Np), out_dtype),
            compiler_params=pltpu.CompilerParams(
                dimension_semantics=("parallel",),
                vmem_limit_bytes=int(min(max(sp_vmem + 8 * _MB, 32 * _MB),
                                         64 * _MB))),
            cost_estimate=cost,
        )(a_p, b_p, bias_p)
        return out_p[:M, :N]

    # ---- K-tiled fallback ----------------------------------------------------
    tn_, Np = _pick_tile(N, tn, 128)
    tk_, Kp = _pick_tile(K, tk, 128)
    a_p = _prepare(a, Mp, Kp, compute_dtype)
    b_p = _prepare(b, Kp, Np, compute_dtype)
    if bias is None:
        bias_p = jnp.zeros((1, Np), jnp.float32)
    else:
        bias_p = _prepare(bias.astype(jnp.float32).reshape(1, N), 1, Np,
                          jnp.float32)
    grid = (Mp // tm_, Np // tn_, Kp // tk_)
    kt_vmem = 2 * (tm_ * tk_ * csize + tk_ * tn_ * csize
                   + tm_ * tn_ * 4 + tn_ * 4)
    cost = pl.CostEstimate(
        flops=2 * Mp * Np * Kp, transcendentals=0,
        bytes_accessed=(Np // tn_) * Mp * Kp * csize
                       + (Mp // tm_) * Kp * Np * csize + Mp * Np * 4 + Np * 4)
    out_p = pl.pallas_call(
        _mm_ktiled_kernel,
        grid=grid,
        in_specs=[
            pl.BlockSpec((tm_, tk_), lambda i, j, k: (i, k)),
            pl.BlockSpec((tk_, tn_), lambda i, j, k: (k, j)),
            pl.BlockSpec((1, tn_), lambda i, j, k: (0, j)),
        ],
        out_specs=pl.BlockSpec((tm_, tn_), lambda i, j, k: (i, j)),
        out_shape=jax.ShapeDtypeStruct((Mp, Np), jnp.float32),
        compiler_params=pltpu.CompilerParams(
            dimension_semantics=("parallel", "parallel", "arbitrary"),
            vmem_limit_bytes=int(min(max(kt_vmem + 16 * _MB, 32 * _MB),
                                     64 * _MB))),
        cost_estimate=cost,
    )(a_p, b_p, bias_p)
    out = out_p[:M, :N]
    if out_dtype != jnp.float32:
        out = out.astype(out_dtype)   # rare path; ktiled accumulates in f32
    return out


def graph_convolution(adj, x, weight, bias=None, *, compute_dtype=jnp.bfloat16):
    """Pallas implementation of GraphConvolution.forward.

    adj: [N, N], x: [N, C_in], weight: [C_in, C_out], bias: optional [C_out].
    Returns [N, C_out] float32.  compute_dtype=bfloat16 feeds the MXU bf16
    operands with f32 accumulation (the adj matmul is HBM-bound, so this is the
    main win); pass jnp.float32 for full precision.
    """
    N, C_in = x.shape
    C_out = weight.shape[1]
    assert adj.shape == (N, N)

    # Cast adj once up front.  In a multi-layer GCN the caller should pre-cast
    # adj a single time and reuse it across layers/epochs (amortized cast).
    adj_c = adj if adj.dtype == compute_dtype else adj.astype(compute_dtype)

    if C_out <= C_in:
        # Hoist x @ W: the N^2 matmul runs against the narrower C_out and the
        # intermediate xw is written in compute_dtype (no f32 HBM round-trip).
        xw = pallas_matmul(x, weight, compute_dtype=compute_dtype,
                           out_dtype=compute_dtype)
        return pallas_matmul(adj_c, xw, bias, compute_dtype=compute_dtype,
                             out_dtype=jnp.float32, tm=512)
    else:
        # Keep the N^2 matmul against C_in (narrower); apply W afterwards.
        ax = pallas_matmul(adj_c, x, compute_dtype=compute_dtype,
                           out_dtype=compute_dtype, tm=512)
        return pallas_matmul(ax, weight, bias, compute_dtype=compute_dtype,
                             out_dtype=jnp.float32)


def xavier_normal(key, in_channels, out_channels):
    # torch.nn.init.xavier_normal_ (gain=1): std = sqrt(2 / (fan_in + fan_out))
    std = math.sqrt(2.0 / (in_channels + out_channels))
    return std * jax.random.normal(key, (in_channels, out_channels),
                                   dtype=jnp.float32)


if __name__ == "__main__":
    key = jax.random.PRNGKey(0)
    k_adj, k_x, k_w, k_a2, k_b2 = jax.random.split(key, 5)

    N = 64        # graph nodes
    C_IN = 32     # in_channels
    C_OUT = 32    # out_channels

    adj = jax.random.uniform(k_adj, (N, N), dtype=jnp.float32)
    x = jax.random.normal(k_x, (N, C_IN), dtype=jnp.float32)
    weight = xavier_normal(k_w, C_IN, C_OUT)
    bias = jnp.zeros((C_OUT,), dtype=jnp.float32)  # module zero-inits bias

    ref = (adj @ x) @ weight

    # f32 compute path: tight correctness check against the torch semantics.
    out_f32 = jax.block_until_ready(
        graph_convolution(adj, x, weight, compute_dtype=jnp.float32))
    assert out_f32.shape == (N, C_OUT)
    assert jnp.allclose(out_f32, ref, atol=2e-3, rtol=1e-3), \
        float(jnp.max(jnp.abs(out_f32 - ref)))

    # Default bf16 compute path (f32 accumulation): looser tolerance.
    out_bf = jax.block_until_ready(graph_convolution(adj, x, weight))
    assert out_bf.shape == (N, C_OUT)
    assert jnp.allclose(out_bf, ref, atol=0.5, rtol=5e-2), \
        float(jnp.max(jnp.abs(out_bf - ref)))

    # bias=True path.
    out_b = jax.block_until_ready(graph_convolution(adj, x, weight, bias))
    assert jnp.allclose(out_b, ref + bias[None, :], atol=0.5, rtol=5e-2)

    # Also exercise the general K-tiled fallback path (small shapes).
    a2 = jax.random.normal(k_a2, (256, 384), dtype=jnp.float32)
    b2 = jax.random.normal(k_b2, (384, 256), dtype=jnp.float32)
    out2 = jax.block_until_ready(
        pallas_matmul(a2, b2, compute_dtype=jnp.float32,
                      tm=128, tn=128, tk=128, allow_single_pass=False))
    assert jnp.allclose(out2, a2 @ b2, atol=5e-3, rtol=1e-4)

    print("KERNEL_OK")
</pallas_src>

<mosaic_0001>
module attributes {stable_mosaic.version = 11 : i64} {
  func.func @_mm_single_pass_kernel(%arg0: i32, %arg1: memref<64x32xf32, #tpu.memory_space<vmem>>, %arg2: memref<32x128xf32, #tpu.memory_space<vmem>>, %arg3: memref<1x128xf32, #tpu.memory_space<vmem>>, %arg4: memref<64x128xf32, #tpu.memory_space<vmem>>) attributes {dimension_semantics = [#tpu.dimension_semantics<parallel>], iteration_bounds = array<i64: 1>, scalar_prefetch = 0 : i64, scratch_operands = 0 : i64, tpu.core_type = #tpu.core_type<tc>, window_params = [{transform_indices = @transform_0, window_bounds = array<i64: 64, 32>}, {pipeline_mode = #tpu.pipeline_mode<synchronous>, transform_indices = @transform_1, window_bounds = array<i64: 32, 128>}, {pipeline_mode = #tpu.pipeline_mode<synchronous>, transform_indices = @transform_2, window_bounds = array<i64: 1, 128>}, {transform_indices = @transform_3, window_bounds = array<i64: 64, 128>}]} {
    %c0 = arith.constant 0 : index
    %c0_0 = arith.constant 0 : index
    %0 = vector.load %arg1[%c0, %c0_0] : memref<64x32xf32, #tpu.memory_space<vmem>>, vector<64x32xf32>
    %c0_1 = arith.constant 0 : index
    %c0_2 = arith.constant 0 : index
    %1 = vector.load %arg2[%c0_1, %c0_2] : memref<32x128xf32, #tpu.memory_space<vmem>>, vector<32x128xf32>
    %cst = arith.constant dense<0.000000e+00> : vector<64x128xf32>
    %2 = tpu.matmul %0, %1, %cst {dimension_numbers = #tpu.dot_dimension_numbers<[1], [0], [0], [1], [0, 0, 1, 1], [], []>} : vector<64x32xf32>, vector<32x128xf32>, vector<64x128xf32> -> vector<64x128xf32>
    %c0_3 = arith.constant 0 : index
    %c0_4 = arith.constant 0 : index
    %3 = vector.load %arg3[%c0_3, %c0_4] : memref<1x128xf32, #tpu.memory_space<vmem>>, vector<1x128xf32>
    %4 = vector.broadcast %3 : vector<1x128xf32> to vector<64x128xf32>
    %5 = arith.addf %2, %4 : vector<64x128xf32>
    %c0_5 = arith.constant 0 : index
    %c0_6 = arith.constant 0 : index
    %6 = vector.load %arg4[%c0_5, %c0_6] : memref<64x128xf32, #tpu.memory_space<vmem>>, vector<64x128xf32>
    tpu.vector_store %arg4[%c0_5, %c0_6], %5 {strides = array<i32>} : memref<64x128xf32, #tpu.memory_space<vmem>>, vector<64x128xf32>,
    return
  }
  func.func @transform_0(%arg0: i32) -> (i32, i32) {
    %c0_i32 = arith.constant 0 : i32
    %c0_i32_0 = arith.constant 0 : i32
    return %arg0, %c0_i32 : i32, i32
  }
  func.func @transform_1(%arg0: i32) -> (i32, i32) {
    %c0_i32 = arith.constant 0 : i32
    %c0_i32_0 = arith.constant 0 : i32
    %c0_i32_1 = arith.constant 0 : i32
    return %c0_i32, %c0_i32_0 : i32, i32
  }
  func.func @transform_2(%arg0: i32) -> (i32, i32) {
    %c0_i32 = arith.constant 0 : i32
    %c0_i32_0 = arith.constant 0 : i32
    %c0_i32_1 = arith.constant 0 : i32
    return %c0_i32, %c0_i32_0 : i32, i32
  }
  func.func @transform_3(%arg0: i32) -> (i32, i32) {
    %c0_i32 = arith.constant 0 : i32
    %c0_i32_0 = arith.constant 0 : i32
    return %arg0, %c0_i32 : i32, i32
  }
}

</mosaic_0001>

<llo_original>
// kernel: tpu_custom_call.1
$region0: #{tpu_custom_call.1}
  #allocation0 [shape = 'u32[]', space=smem, size = 0x4, offset = 0x4, fixed_abs, tag = 'smem constant byte address 0x4 - core index']
  #allocation1 [shape = 'u32[72,128]{1,0:T(1,128)}', space=vmem, size = 0x9000, scoped, tag = 'internal scratch']
  %s0 = inlined_call_operand.vmem [shape: f32[64,32], index: 0, kind: input, shape index: {}]
  %s1 = inlined_call_operand.vmem [shape: f32[32,128], index: 1, kind: input, shape index: {}]
  %s2 = inlined_call_operand.vmem [shape: f32[1,128], index: 2, kind: input, shape index: {}]
  %s3 = inlined_call_operand.hbm [shape: f32[64,128], index: 3, kind: output, shape index: {}]
  %s4 = sld [smem:[#allocation0]]
  $region22: #{tpu_custom_call.1} parent=0
    _
  %s6 = ssub.s32 1, %s4
  %s7 = scalar_select 0, %s6, %s4
  $region1: #{tpu_custom_call.1} parent=0
    #allocation2 [shape = 'u8[32768]{0}', space=vmem, size = 0x8000, scoped, tag = 'output window, operand 0, single buffered']
    #allocation3 [shape = 's32[1]{0}', space=sflag, size = 0x4, scoped, tag = 'scoped memory for tpu_custom_call.1']
    %8 = vsyncpa [#allocation3], 0
    // Predicated region
    $region2: #{tpu_custom_call.1} parent=1 // pred_check
      _
    $region3: #{tpu_custom_call.1} parent=1 // pred_check_branch
      %10 = sbr.rel (0) target = $region5
    $region4: #{tpu_custom_call.1} parent=1 // pred_region
      _
    $region5: #{tpu_custom_call.1} parent=1 // pred_fallthru
      _
    // Predicated region
    $region6: #{tpu_custom_call.1} parent=1 // pred_check
      _
    $region7: #{tpu_custom_call.1} parent=1 // pred_check_branch
      %12 = sbr.rel (0) target = $region9
    $region8: #{tpu_custom_call.1} parent=1 // pred_region
      _
    $region9: #{tpu_custom_call.1} parent=1 // pred_fallthru
      _
    // Predicated region
    $region10: #{tpu_custom_call.1} parent=1 // pred_check
      _
    $region11: #{tpu_custom_call.1} parent=1 // pred_check_branch
      %14 = sbr.rel (0) target = $region13
    $region12: #{tpu_custom_call.1} parent=1 // pred_region
      _
    $region13: #{tpu_custom_call.1} parent=1 // pred_fallthru
      _
    %v15 = vld [vmem:[%s0] sm:$0xff]
    %v16 = vld [vmem:[%s0 + $0x8] sm:$0xff]
    %v17 = vld [vmem:[%s0 + $0x10] sm:$0xff]
    %v18 = vld [vmem:[%s0 + $0x18] sm:$0xff]
    %v19 = vld [vmem:[%s0 + $0x20] sm:$0xff]
    %v20 = vld [vmem:[%s0 + $0x28] sm:$0xff]
    %v21 = vld [vmem:[%s0 + $0x30] sm:$0xff]
    %v22 = vld [vmem:[%s0 + $0x38] sm:$0xff]
    %v23 = vld [vmem:[%s1] sm:$0xff]
    %v24 = vld [vmem:[%s1 + $0x8] sm:$0xff]
    %v25 = vld [vmem:[%s1 + $0x10] sm:$0xff]
    %v26 = vld [vmem:[%s1 + $0x18] sm:$0xff]
    %v27 = vld [vmem:[%s2] sm:$0x1]
    %v29 = vperm.slane %v27, 0
    %vm31 = vcmask 261120
    %v33 = vsel %vm31, %v15, 0
    %v36 = vsel %vm31, %v16, 0
    %v39 = vsel %vm31, %v17, 0
    %v42 = vsel %vm31, %v18, 0
    %v45 = vsel %vm31, %v19, 0
    %v48 = vsel %vm31, %v20, 0
    %v51 = vsel %vm31, %v21, 0
    %v54 = vsel %vm31, %v22, 0
    %56 = vmatpush.msra.mxu0 0.0
    %57 = vmatpush.msra.mxu0 0.0
    %58 = vmatpush.msra.mxu0 0.0
    %59 = vmatpush.msra.mxu0 0.0
    %60 = vmatpush.msra.mxu0 0.0
    %61 = vmatpush.msra.mxu0 0.0
    %62 = vmatpush.msra.mxu0 0.0
    %63 = vmatpush.msra.mxu0 0.0
    %64 = vmatpush.msra.mxu0 0.0
    %65 = vmatpush.msra.mxu0 0.0
    %66 = vmatpush.msra.mxu0 0.0
    %67 = vmatpush.msra.mxu0 0.0
    %68 = vmatpush.msra.mxu0 %v26
    %69 = vmatpush.msra.mxu0 %v25
    %70 = vmatpush.msra.mxu0 %v24
    %71 = vmatpush.msra.mxu0 %v23
    %72 = vmatmul.f32.gmra.mxu0 %v33
    %v73 = vpop.f32.mrf.mxu0
    %v74 = vadd.f32 %v29, %v73
    %75 = vmatmul.f32.gmra.mxu0 %v36
    %v76 = vpop.f32.mrf.mxu0
    %v77 = vadd.f32 %v29, %v76
    %78 = vmatmul.f32.gmra.mxu0 %v39
    %v79 = vpop.f32.mrf.mxu0
    %v80 = vadd.f32 %v29, %v79
    %81 = vmatmul.f32.gmra.mxu0 %v42
    %v82 = vpop.f32.mrf.mxu0
    %v83 = vadd.f32 %v29, %v82
    %84 = vmatmul.f32.gmra.mxu0 %v45
    %v85 = vpop.f32.mrf.mxu0
    %v86 = vadd.f32 %v29, %v85
    %87 = vmatmul.f32.gmra.mxu0 %v48
    %v88 = vpop.f32.mrf.mxu0
    %v89 = vadd.f32 %v29, %v88
    %90 = vmatmul.f32.gmra.mxu0 %v51
    %v91 = vpop.f32.mrf.mxu0
    %v92 = vadd.f32 %v29, %v91
    %93 = vmatmul.f32.gmra.mxu0 %v54
    %v94 = vpop.f32.mrf.mxu0
    %v95 = vadd.f32 %v29, %v94
    %96 = vdwg.mxu0
    %97 = vst [vmem:[#allocation2] sm:$0xff] %v74
    %98 = vst [vmem:[#allocation2 + $0x8] sm:$0xff] %v77
    %99 = vst [vmem:[#allocation2 + $0x10] sm:$0xff] %v80
    %100 = vst [vmem:[#allocation2 + $0x18] sm:$0xff] %v83
    %101 = vst [vmem:[#allocation2 + $0x20] sm:$0xff] %v86
    %102 = vst [vmem:[#allocation2 + $0x28] sm:$0xff] %v89
    %103 = vst [vmem:[#allocation2 + $0x30] sm:$0xff] %v92
    %104 = vst [vmem:[#allocation2 + $0x38] sm:$0xff] %v95
    // Predicated region
    $region14: #{tpu_custom_call.1} parent=1 // pred_check
      _
    $region15: #{tpu_custom_call.1} parent=1 // pred_check_branch
      %106 = sbr.rel (0) target = $region17
    $region16: #{tpu_custom_call.1} parent=1 // pred_region
      %108 = vsyncadd [#allocation3], 0
      %s109 = sshll.u32 [#allocation2], 4
      %s110 = int_to_ptr.vmem [resolvable:$true] %s109
      %s111 = sshll.u32 %s3, 4
      %s112 = int_to_ptr.hbm [resolvable:$true] %s111
      %117 = dma.vmem_to_hbm [thread:$0]  %s110, 1024, %s112, [#allocation3], 128, 128, 8
    $region17: #{tpu_custom_call.1} parent=1 // pred_fallthru
      _
    // Predicated region
    $region18: #{tpu_custom_call.1} parent=1 // pred_check
      _
    $region19: #{tpu_custom_call.1} parent=1 // pred_check_branch
      %119 = sbr.rel (0) target = $region21
    $region20: #{tpu_custom_call.1} parent=1 // pred_region
      %121 = dma.done [#allocation3], 1024
    $region21: #{tpu_custom_call.1} parent=1 // pred_fallthru
      _
    %122 = vsyncpa [#allocation3], 1

</llo_original>
